<compile_context>
chip_gen: v5e
topology: v5e:2x2
jax: 0.10.0
libtpu: 0.0.40
codegen_flags: <defaults>
</compile_context>

<pallas_src>
import functools

import jax
import jax.numpy as jnp
from jax.experimental import pallas as pl
from jax.experimental.pallas import tpu as pltpu


def _round_up(x, m):
    return ((x + m - 1) // m) * m


def _vmem_budget_bytes():
    """Generation-aware scoped-VMEM budget (~75% of physical VMEM per core)."""
    cap = 64 * 1024 * 1024  # conservative fallback (v7x per-TC capacity)
    try:
        info = pltpu.get_tpu_info()
        cap = int(getattr(info, "vmem_capacity_bytes", cap))
    except Exception:
        pass
    return int(cap * 0.75)


def _patch_embed_kernel(x_ref, w_ref, shift_ref, o_ref):
    """o = (x @ w_scaled) + shift    (BN scale folded into w, bias into shift).

    x_ref:     [TILE_M, K_pad]  bf16 patches (pipelined)
    w_ref:     [K_pad, E_pad]   bf16 conv weight * bn_scale (resident)
    shift_ref: [1, E_pad]       f32  bn_shift + conv_bias * bn_scale (resident)
    o_ref:     [TILE_M, E_pad]  out_dtype
    """
    acc = jnp.dot(x_ref[...], w_ref[...], preferred_element_type=jnp.float32)
    o_ref[...] = (acc + shift_ref[...]).astype(o_ref.dtype)


def patch_embedding_forward(x, conv_w, conv_b, bn_gamma, bn_beta,
                            bn_mean, bn_var, *, patch_size, stride,
                            eps=1e-5, tile_m=None, out_dtype=jnp.float32):
    """Equivalent of Embedding.forward for kernel_size == stride, padding == 0."""
    assert patch_size == stride, "patch-embed kernel assumes kernel_size == stride"
    B, C, H, W = x.shape
    E = conv_w.shape[0]
    p = patch_size
    Hout, Wout = H // p, W // p
    M = B * Hout * Wout
    K = C * p * p
    out_itemsize = jnp.dtype(out_dtype).itemsize

    # --- glue: patch extraction (layout only; bf16 first so the pass moves 2B/elem) ---
    # [B, C, H, W] -> [B, C, Hout, p, Wout, p] -> [B, Hout, Wout, C, p, p] -> [M, K]
    x_p = x.astype(jnp.bfloat16).reshape(B, C, Hout, p, Wout, p)
    x_p = jnp.transpose(x_p, (0, 2, 4, 1, 3, 5)).reshape(M, K)

    # --- fold BN (eval mode) + conv bias; scale goes into the weight (f32 fold) ---
    bn_scale = bn_gamma / jnp.sqrt(bn_var + eps)
    shift = (bn_beta - bn_mean * bn_scale) + conv_b * bn_scale
    # conv weight [E, C, p, p] -> [K, E], pre-scaled by bn_scale per output channel
    w_mat = conv_w.reshape(E, K).T * bn_scale[None, :]

    # --- padding: K lane-aligned; E lane-dense only when it doesn't blow up HBM ---
    K_pad = _round_up(K, 128)
    if E % 128 == 0:
        E_pad = E
    elif E < 64:
        E_pad = E            # full-dim block (masked vst) beats a 4x-padded output slab
    else:
        E_pad = _round_up(E, 128)

    # --- tile_m selection: scale with VMEM budget, multiple of 16, >= 2 tiles ---
    budget = _vmem_budget_bytes()

    def _vmem_need(tm):
        return (2 * tm * K_pad * 2              # x tile   (bf16, double-buffered)
                + 2 * K_pad * E_pad * 2         # weight   (bf16, counted at 2x: default buffering)
                + 2 * tm * E_pad * out_itemsize # out tile (double-buffered)
                + 2 * 1 * E_pad * 4)            # shift row (f32, counted at 2x)

    if tile_m is None:
        fixed = 2 * K_pad * E_pad * 2 + 2 * E_pad * 4
        per_row = 2 * K_pad * 2 + 2 * E_pad * out_itemsize
        tile_m = (budget - fixed) // per_row if budget > fixed else 256
        tile_m = int(max(256, min(4096, tile_m)))
    tile_m = max(16, _round_up(int(tile_m), 16))
    # cap at ceil(M/2) so grid_m >= 2 whenever M allows it (v7x megacore).
    tile_m = min(tile_m, max(16, _round_up(pl.cdiv(M, 2), 16)))
    while tile_m > 16 and _vmem_need(tile_m) > budget:
        tile_m = max(16, _round_up(tile_m // 2, 16))

    M_pad = _round_up(M, tile_m)
    grid_m = M_pad // tile_m

    x_p = jnp.pad(x_p, ((0, M_pad - M), (0, K_pad - K)))
    w_mat = jnp.pad(w_mat, ((0, K_pad - K), (0, E_pad - E))).astype(jnp.bfloat16)
    shift_row = jnp.pad(shift, (0, E_pad - E)).reshape(1, E_pad).astype(jnp.float32)

    vmem_need = _vmem_need(tile_m)
    vmem_limit = int(min(max(2 * vmem_need, 16 * 1024 * 1024),
                         max(budget, vmem_need)))

    cost = pl.CostEstimate(
        flops=2 * M_pad * K_pad * E_pad,
        transcendentals=0,
        bytes_accessed=(M_pad * K_pad * 2 + K_pad * E_pad * 2
                        + M_pad * E_pad * out_itemsize + E_pad * 4),
    )

    out_flat = pl.pallas_call(
        _patch_embed_kernel,
        out_shape=jax.ShapeDtypeStruct((M_pad, E_pad), out_dtype),
        grid=(grid_m,),
        in_specs=[
            # patch tile (pipelined; bump to pipeline_mode=pl.Buffered(3) if a
            # profile shows exposed input DMA at small K_pad)
            pl.BlockSpec((tile_m, K_pad), lambda i: (i, 0)),
            pl.BlockSpec((K_pad, E_pad), lambda i: (0, 0)),   # weight (resident)
            pl.BlockSpec((1, E_pad), lambda i: (0, 0)),       # folded BN shift (+bias)
        ],
        out_specs=pl.BlockSpec((tile_m, E_pad), lambda i: (i, 0)),
        compiler_params=pltpu.CompilerParams(
            dimension_semantics=("parallel",),
            vmem_limit_bytes=vmem_limit),
        cost_estimate=cost,
    )(x_p, w_mat, shift_row)

    # --- glue: slice off padding, back to NCHW ---
    out = out_flat[:M, :E].reshape(B, Hout, Wout, E)
    out = jnp.transpose(out, (0, 3, 1, 2))        # [B, E, Hout, Wout]
    return out


if __name__ == "__main__":
    # Small, deterministic example consistent with the module's forward:
    #   B=2, in_chans=4, H=W=16, patch_size=stride=4, embed_dim=32
    B, C, H, W = 2, 4, 16, 16
    patch_size = stride = 4
    embed_dim = 32

    key = jax.random.PRNGKey(0)
    k_x, k_w, k_b, k_g, k_be, k_m, k_v = jax.random.split(key, 7)

    x = jax.random.normal(k_x, (B, C, H, W), dtype=jnp.float32)

    # Conv2d(in_chans=C, embed_dim, kernel_size=patch_size, stride=stride)
    conv_w = jax.random.normal(k_w, (embed_dim, C, patch_size, patch_size),
                               dtype=jnp.float32) * 0.05
    conv_b = jax.random.normal(k_b, (embed_dim,), dtype=jnp.float32) * 0.05

    # BatchNorm2d(embed_dim) parameters (affine + running stats, eval-mode fold)
    bn_gamma = 1.0 + 0.1 * jax.random.normal(k_g, (embed_dim,), dtype=jnp.float32)
    bn_beta = 0.1 * jax.random.normal(k_be, (embed_dim,), dtype=jnp.float32)
    bn_mean = 0.1 * jax.random.normal(k_m, (embed_dim,), dtype=jnp.float32)
    bn_var = jnp.abs(1.0 + 0.1 * jax.random.normal(k_v, (embed_dim,),
                                                   dtype=jnp.float32))

    fwd = jax.jit(functools.partial(patch_embedding_forward,
                                    patch_size=patch_size, stride=stride))
    out = fwd(x, conv_w, conv_b, bn_gamma, bn_beta, bn_mean, bn_var)
    jax.block_until_ready(out)

    assert out.shape == (B, embed_dim, H // stride, W // stride), out.shape
    assert jnp.all(jnp.isfinite(out))

    # Pure-JAX reference (f32) to confirm semantics (bf16 MXU inputs -> loose tol).
    p = patch_size
    Hout, Wout = H // p, W // p
    x_ref = x.reshape(B, C, Hout, p, Wout, p)
    x_ref = jnp.transpose(x_ref, (0, 2, 4, 1, 3, 5)).reshape(B * Hout * Wout, -1)
    y_ref = x_ref @ conv_w.reshape(embed_dim, -1).T + conv_b
    scale_ref = bn_gamma / jnp.sqrt(bn_var + 1e-5)
    y_ref = y_ref * scale_ref + (bn_beta - bn_mean * scale_ref)
    y_ref = jnp.transpose(y_ref.reshape(B, Hout, Wout, embed_dim), (0, 3, 1, 2))
    rel_err = jnp.max(jnp.abs(out - y_ref)) / (jnp.max(jnp.abs(y_ref)) + 1e-6)
    assert rel_err < 5e-2, float(rel_err)

    print("KERNEL_OK")
</pallas_src>

<mosaic_0001>
module attributes {stable_mosaic.version = 11 : i64} {
  func.func @_patch_embed_kernel(%arg0: i32, %arg1: memref<16x128xbf16, #tpu.memory_space<vmem>>, %arg2: memref<128x32xbf16, #tpu.memory_space<vmem>>, %arg3: memref<1x32xf32, #tpu.memory_space<vmem>>, %arg4: memref<16x32xf32, #tpu.memory_space<vmem>>) attributes {dimension_semantics = [#tpu.dimension_semantics<parallel>], iteration_bounds = array<i64: 2>, scalar_prefetch = 0 : i64, scratch_operands = 0 : i64, tpu.core_type = #tpu.core_type<tc>, window_params = [{transform_indices = @transform_0, window_bounds = array<i64: 16, 128>}, {pipeline_mode = #tpu.pipeline_mode<synchronous>, transform_indices = @transform_1, window_bounds = array<i64: 128, 32>}, {pipeline_mode = #tpu.pipeline_mode<synchronous>, transform_indices = @transform_2, window_bounds = array<i64: 1, 32>}, {transform_indices = @transform_3, window_bounds = array<i64: 16, 32>}]} {
    %c0 = arith.constant 0 : index
    %c0_0 = arith.constant 0 : index
    %0 = vector.load %arg1[%c0, %c0_0] : memref<16x128xbf16, #tpu.memory_space<vmem>>, vector<16x128xbf16>
    %c0_1 = arith.constant 0 : index
    %c0_2 = arith.constant 0 : index
    %1 = vector.load %arg2[%c0_1, %c0_2] : memref<128x32xbf16, #tpu.memory_space<vmem>>, vector<128x32xbf16>
    %cst = arith.constant dense<0.000000e+00> : vector<16x32xf32>
    %2 = tpu.matmul %0, %1, %cst {dimension_numbers = #tpu.dot_dimension_numbers<[1], [0], [0], [1], [0, 0, 1, 1], [], []>} : vector<16x128xbf16>, vector<128x32xbf16>, vector<16x32xf32> -> vector<16x32xf32>
    %c0_3 = arith.constant 0 : index
    %c0_4 = arith.constant 0 : index
    %3 = vector.load %arg3[%c0_3, %c0_4] : memref<1x32xf32, #tpu.memory_space<vmem>>, vector<1x32xf32>
    %4 = vector.broadcast %3 : vector<1x32xf32> to vector<16x32xf32>
    %5 = arith.addf %2, %4 : vector<16x32xf32>
    %c0_5 = arith.constant 0 : index
    %c0_6 = arith.constant 0 : index
    %6 = vector.load %arg4[%c0_5, %c0_6] : memref<16x32xf32, #tpu.memory_space<vmem>>, vector<16x32xf32>
    tpu.vector_store %arg4[%c0_5, %c0_6], %5 {strides = array<i32>} : memref<16x32xf32, #tpu.memory_space<vmem>>, vector<16x32xf32>,
    return
  }
  func.func @transform_0(%arg0: i32) -> (i32, i32) {
    %c0_i32 = arith.constant 0 : i32
    %c0_i32_0 = arith.constant 0 : i32
    return %arg0, %c0_i32 : i32, i32
  }
  func.func @transform_1(%arg0: i32) -> (i32, i32) {
    %c0_i32 = arith.constant 0 : i32
    %c0_i32_0 = arith.constant 0 : i32
    %c0_i32_1 = arith.constant 0 : i32
    return %c0_i32, %c0_i32_0 : i32, i32
  }
  func.func @transform_2(%arg0: i32) -> (i32, i32) {
    %c0_i32 = arith.constant 0 : i32
    %c0_i32_0 = arith.constant 0 : i32
    %c0_i32_1 = arith.constant 0 : i32
    return %c0_i32, %c0_i32_0 : i32, i32
  }
  func.func @transform_3(%arg0: i32) -> (i32, i32) {
    %c0_i32 = arith.constant 0 : i32
    %c0_i32_0 = arith.constant 0 : i32
    return %arg0, %c0_i32 : i32, i32
  }
}

</mosaic_0001>

<llo_original>
// kernel: patch_embedding_forward.1
$region0: #{patch_embedding_forward.1}
  #allocation0 [shape = 'u32[]', space=smem, size = 0x4, offset = 0x4, fixed_abs, tag = 'smem constant byte address 0x4 - core index']
  #allocation1 [shape = 'u32[72,128]{1,0:T(1,128)}', space=vmem, size = 0x9000, scoped, tag = 'internal scratch']
  %s0 = inlined_call_operand.vmem [shape: bf16[32,128], index: 0, kind: input, shape index: {}]
  %s1 = inlined_call_operand.vmem [shape: bf16[128,32], index: 1, kind: input, shape index: {}]
  %s2 = inlined_call_operand.vmem [shape: f32[1,32], index: 2, kind: input, shape index: {}]
  %s3 = inlined_call_operand.hbm [shape: f32[32,32], index: 3, kind: output, shape index: {}]
  %s4 = sld [smem:[#allocation0]]
  $region45: #{patch_embedding_forward.1} parent=0
    _
  %s6 = ssub.s32 1, %s4
  %s7 = scalar_select 0, %s6, %s4
  $region1: #{patch_embedding_forward.1} parent=0
    #allocation2 [shape = 'u8[16384]{0}', space=vmem, size = 0x4000, scoped, tag = 'output window, operand 0']
    #allocation3 [shape = 's32[2]{0}', space=sflag, size = 0x8, scoped, tag = 'scoped memory for patch_embedding_forward.1']
    %8 = vsyncpa [#allocation3], 0
    %s9 = scalar_lea.sflag [#allocation3], 1
    %10 = vsyncpa %s9, 0
    loop: start=0, step=1, limit=4
    $region2: #{patch_embedding_forward.1} parent=1 // loop_pre_header
      _
    $region3: #{patch_embedding_forward.1} parent=1 // loop_header
      %s12 = sphi 0, %s16
      %p13 = scmp.ge.s32.totalorder %s12, 4
      %s22 = sphi 0, %s24
      %s25 = sphi 0, %s22
      %s26 = sphi 0, %s25
      %s42 = sphi 0, %s26
      %s46 = sphi 0, %s46
      %s48 = sphi 0, %s46
      %s49 = sphi 0, %s48
      %s63 = sphi 0, %s49
      %s67 = sphi 0, %s67
      %s69 = sphi 0, %s67
      %s70 = sphi 0, %s69
      %s84 = sphi 0, %s70
      %s90 = sphi 0, %s92
      %s93 = sphi 0, %s90
      %s94 = sphi 0, %s93
      %s110 = sphi 0, %s94
    $region4: #{patch_embedding_forward.1} parent=1 // loop_header_branch
      %15 = sbr.rel (%p13) target = $region8
    $region5: #{patch_embedding_forward.1} parent=1 // loop_body
      %s17 = ssub.s32 %s12, 1
      %s18 = ssub.s32 %s12, 2
      %s19 = sadd.s32 %s12, 1
      %s20 = ssub.s32 %s12, %s19
      %p21 = scmp.eq.s32.totalorder %s20, 0
      %s23 = sadd.s32 %s22, 1
      %s24 = scalar_select %p21, %s22, %s23
      %p27 = pneg %p21
      %p28 = scmp.eq.s32.totalorder %s12, 1
      %p29 = por %p27, %p28
      %p30 = scmp.ne.s32.totalorder %s22, %s25
      %p31 = scmp.eq.s32.totalorder %s12, 0
      %p32 = por %p30, %p31
      %p33 = scmp.ne.s32.totalorder %s22, %s25
      %p34 = scmp.eq.s32.totalorder %s17, 1
      %p35 = por %p33, %p34
      %p36 = scmp.ne.s32.totalorder %s25, %s26
      %p37 = scmp.eq.s32.totalorder %s17, 0
      %p38 = por %p36, %p37
      %p39 = scmp.ne.s32.totalorder %s25, %s26
      %p40 = scmp.eq.s32.totalorder %s18, 1
      %p41 = por %p39, %p40
      %p43 = scmp.ne.s32.totalorder %s26, %s42
      %p44 = scmp.eq.s32.totalorder %s18, 0
      %p45 = por %p43, %p44
      %s47 = sadd.s32 %s46, 1
      %p50 = scmp.eq.s32.totalorder %s12, 1
      %p51 = scmp.ne.s32.totalorder %s46, %s48
      %p52 = scmp.eq.s32.totalorder %s12, 0
      %p53 = por %p51, %p52
      %p54 = scmp.ne.s32.totalorder %s46, %s48
      %p55 = scmp.eq.s32.totalorder %s17, 1
      %p56 = por %p54, %p55
      %p57 = scmp.ne.s32.totalorder %s48, %s49
      %p58 = scmp.eq.s32.totalorder %s17, 0
      %p59 = por %p57, %p58
      %p60 = scmp.ne.s32.totalorder %s48, %s49
      %p61 = scmp.eq.s32.totalorder %s18, 1
      %p62 = por %p60, %p61
      %p64 = scmp.ne.s32.totalorder %s49, %s63
      %p65 = scmp.eq.s32.totalorder %s18, 0
      %p66 = por %p64, %p65
      %s68 = sadd.s32 %s67, 1
      %p71 = scmp.eq.s32.totalorder %s12, 1
      %p72 = scmp.ne.s32.totalorder %s67, %s69
      %p73 = scmp.eq.s32.totalorder %s12, 0
      %p74 = por %p72, %p73
      %p75 = scmp.ne.s32.totalorder %s67, %s69
      %p76 = scmp.eq.s32.totalorder %s17, 1
      %p77 = por %p75, %p76
      %p78 = scmp.ne.s32.totalorder %s69, %s70
      %p79 = scmp.eq.s32.totalorder %s17, 0
      %p80 = por %p78, %p79
      %p81 = scmp.ne.s32.totalorder %s69, %s70
      %p82 = scmp.eq.s32.totalorder %s18, 1
      %p83 = por %p81, %p82
      %p85 = scmp.ne.s32.totalorder %s70, %s84
      %p86 = scmp.eq.s32.totalorder %s18, 0
      %p87 = por %p85, %p86
      %s88 = ssub.s32 %s12, %s19
      %p89 = scmp.eq.s32.totalorder %s88, 0
      %s91 = sadd.s32 %s90, 1
      %s92 = scalar_select %p89, %s90, %s91
      %p95 = pneg %p89
      %p96 = scmp.eq.s32.totalorder %s12, 1
      %p97 = por %p95, %p96
      %p98 = scmp.ne.s32.totalorder %s90, %s93
      %p99 = scmp.eq.s32.totalorder %s12, 0
      %p100 = por %p98, %p99
      %p101 = scmp.ne.s32.totalorder %s90, %s93
      %p102 = scmp.eq.s32.totalorder %s17, 1
      %p103 = por %p101, %p102
      %p104 = scmp.ne.s32.totalorder %s93, %s94
      %p105 = scmp.eq.s32.totalorder %s17, 0
      %p106 = por %p104, %p105
      %p107 = scmp.ne.s32.totalorder %s93, %s94
      %p108 = scmp.eq.s32.totalorder %s18, 1
      %p109 = por %p107, %p108
      %p111 = scmp.ne.s32.totalorder %s94, %s110
      %p112 = scmp.eq.s32.totalorder %s18, 0
      %p113 = por %p111, %p112
      %p114 = scmp.le.s32.totalorder 1, %s12
      %p115 = scmp.lt.s32.totalorder %s12, 3
      %p116 = pnand %p114, %p115
      %p117 = pneg %p116
      // Predicated region
      $region9: #{patch_embedding_forward.1} parent=5 // pred_check
        _
      $region10: #{patch_embedding_forward.1} parent=5 // pred_check_branch
        %119 = sbr.rel (%p116) target = $region12
      $region11: #{patch_embedding_forward.1} parent=5 // pred_region
        %s120 = ssub.s32 %s12, 1
        // Predicated region
        $region13: #{patch_embedding_forward.1} parent=11 // pred_check
          %p121 = pneg %p59
        $region14: #{patch_embedding_forward.1} parent=11 // pred_check_branch
          %123 = sbr.rel (%p121) target = $region16
        $region15: #{patch_embedding_forward.1} parent=11 // pred_region
          _
        $region16: #{patch_embedding_forward.1} parent=11 // pred_fallthru
          _
        // Predicated region
        $region17: #{patch_embedding_forward.1} parent=11 // pred_check
          %p124 = pneg %p80
        $region18: #{patch_embedding_forward.1} parent=11 // pred_check_branch
          %126 = sbr.rel (%p124) target = $region20
        $region19: #{patch_embedding_forward.1} parent=11 // pred_region
          _
        $region20: #{patch_embedding_forward.1} parent=11 // pred_fallthru
          _
      $region12: #{patch_embedding_forward.1} parent=5 // pred_fallthru
        _
      %p127 = scmp.lt.s32.totalorder %s12, 2
      // Predicated region
      $region21: #{patch_embedding_forward.1} parent=5 // pred_check
        %p128 = pneg %p127
      $region22: #{patch_embedding_forward.1} parent=5 // pred_check_branch
        %130 = sbr.rel (%p128) target = $region24
      $region23: #{patch_embedding_forward.1} parent=5 // pred_region
        // Predicated region
        $region25: #{patch_embedding_forward.1} parent=23 // pred_check
          %p131 = pneg %p32
        $region26: #{patch_embedding_forward.1} parent=23 // pred_check_branch
          %133 = sbr.rel (%p131) target = $region28
        $region27: #{patch_embedding_forward.1} parent=23 // pred_region
          %s134 = smul.u32 2, %s12
          %p135 = scmp.lt.s32.totalorder %s134, 3
          %s136 = scalar_select %p135, %s134, 3
          %s137 = smul.addr %s136, 4
          %s138 = scalar_lea.vmem %s0, %s137
          %s139 = smul.u32 2, %s12
        $region28: #{patch_embedding_forward.1} parent=23 // pred_fallthru
          _
      $region24: #{patch_embedding_forward.1} parent=5 // pred_fallthru
        _
      %p140 = scmp.le.s32.totalorder 1, %s12
      %p141 = scmp.lt.s32.totalorder %s12, 3
      %p142 = pnand %p140, %p141
      %p143 = pneg %p142
      // Predicated region
      $region29: #{patch_embedding_forward.1} parent=5 // pred_check
        _
      $region30: #{patch_embedding_forward.1} parent=5 // pred_check_branch
        %145 = sbr.rel (%p142) target = $region32
      $region31: #{patch_embedding_forward.1} parent=5 // pred_region
        %s146 = ssub.s32 %s12, 1
        %s147 = smul.u32 2, %s17
        %p148 = scmp.lt.s32.totalorder %s147, 3
        %s149 = scalar_select %p148, %s147, 3
        %s150 = smul.addr %s149, 4
        %s151 = scalar_lea.vmem %s0, %s150
        %p152 = pneg %p38
        %p153 = pneg %p35
        %p154 = pneg %p59
        %p155 = pneg %p56
        %p156 = pneg %p80
        %p157 = pneg %p77
        %p158 = pneg %p106
        %p159 = pneg %p103
        %s160 = sand.u32 %s93, 1
        %s161 = scalar_lea.sflag [#allocation3], %s160
        %s162 = sand.u32 %s93, 1
        %s163 = smul.addr %s162, 16
        %s164 = scalar_lea.vmem [#allocation2], %s163
        %s165 = smul.u32 2, %s17
        %p166 = scmp.lt.s32.totalorder %s165, 3
        %s167 = scalar_select %p166, %s165, 3
        %s168 = smul.addr %s167, 4
        %s169 = scalar_lea.vmem %s0, %s168
        %s170 = smul.u32 2, %s17
        %s171 = smul.u32 2, %s17
        %v172 = vld [vmem:[%s169] sm:$0xf]
        %v173 = vld [vmem:[%s169 + $0x4] sm:$0xf]
        %v174 = vld [vmem:[%s1] sm:$0xf]
        %v175 = vld [vmem:[%s1 + $0x4] sm:$0xf]
        %v176 = vld [vmem:[%s1 + $0x8] sm:$0xf]
        %v177 = vld [vmem:[%s1 + $0xc] sm:$0xf]
        %v178 = vld [vmem:[%s1 + $0x10] sm:$0xf]
        %v179 = vld [vmem:[%s1 + $0x14] sm:$0xf]
        %v180 = vld [vmem:[%s1 + $0x18] sm:$0xf]
        %v181 = vld [vmem:[%s1 + $0x1c] sm:$0xf]
        %v182 = vld [vmem:[%s1 + $0x20] sm:$0xf]
        %v183 = vld [vmem:[%s1 + $0x24] sm:$0xf]
        %v184 = vld [vmem:[%s1 + $0x28] sm:$0xf]
        %v185 = vld [vmem:[%s1 + $0x2c] sm:$0xf]
        %v186 = vld [vmem:[%s1 + $0x30] sm:$0xf]
        %v187 = vld [vmem:[%s1 + $0x34] sm:$0xf]
        %v188 = vld [vmem:[%s1 + $0x38] sm:$0xf]
        %v189 = vld [vmem:[%s1 + $0x3c] sm:$0xf]
        %v190 = vld [vmem:[%s2] sm:$0x1]
        %v192 = vperm.slane %v190, 0
        %v196 = vunpack.c.l.b16 %v172
        %v197 = vunpack.c.l.b16 %v173
        %v198 = vpack.c.b16 %v197, %v196
        %v216 = vunpack.c.l.b16 %v174
        %v217 = vunpack.c.l.b16 %v175
        %v218 = vunpack.c.l.b16 %v176
        %v219 = vunpack.c.l.b16 %v177
        %v220 = vunpack.c.l.b16 %v178
        %v221 = vunpack.c.l.b16 %v179
        %v222 = vunpack.c.l.b16 %v180
        %v223 = vunpack.c.l.b16 %v181
        %v224 = vunpack.c.l.b16 %v182
        %v225 = vunpack.c.l.b16 %v183
        %v226 = vunpack.c.l.b16 %v184
        %v227 = vunpack.c.l.b16 %v185
        %v228 = vunpack.c.l.b16 %v186
        %v229 = vunpack.c.l.b16 %v187
        %v230 = vunpack.c.l.b16 %v188
        %v231 = vunpack.c.l.b16 %v189
        %v232 = vpack.c.b16 %v217, %v216
        %v233 = vpack.c.b16 %v219, %v218
        %v234 = vpack.c.b16 %v221, %v220
        %v235 = vpack.c.b16 %v223, %v222
        %v236 = vpack.c.b16 %v225, %v224
        %v237 = vpack.c.b16 %v227, %v226
        %v238 = vpack.c.b16 %v229, %v228
        %v239 = vpack.c.b16 %v231, %v230
        %248 = vmatpush.bf16.msra.mxu0 %v239
        %249 = vmatpush.bf16.msra.mxu0 %v238
        %250 = vmatpush.bf16.msra.mxu0 %v237
        %251 = vmatpush.bf16.msra.mxu0 %v236
        %252 = vmatpush.bf16.msra.mxu0 %v235
        %253 = vmatpush.bf16.msra.mxu0 %v234
        %254 = vmatpush.bf16.msra.mxu0 %v233
        %255 = vmatpush.bf16.msra.mxu0 %v232
        %256 = vmatmul.bf16.gmra.mxu0 %v198
        %v257 = vpop.f32.mrf.mxu0
        %v258 = vadd.f32 %v192, %v257
        %v259 = vpop.f32.mrf.mxu0
        %v260 = vadd.f32 %v192, %v259
        %261 = vdwg.mxu0
        %vm262 = vcmask 261120
        %263 = vst.msk [vmem:[%s164] sm:$0xff] %vm262, %v258
        %264 = vst.msk [vmem:[%s164 + $0x8] sm:$0xff] %vm262, %v260
        %s265 = sand.u32 %s93, 1
        %s266 = scalar_lea.sflag [#allocation3], %s265
        %s267 = sand.u32 %s93, 1
        %s268 = smul.addr %s267, 16
        %s269 = scalar_lea.vmem [#allocation2], %s268
        // Predicated region
        $region33: #{patch_embedding_forward.1} parent=31 // pred_check
          %p270 = pneg %p103
        $region34: #{patch_embedding_forward.1} parent=31 // pred_check_branch
          %272 = sbr.rel (%p270) target = $region36
        $region35: #{patch_embedding_forward.1} parent=31 // pred_region
          %s273 = smul.u32 2, %s17
          %275 = vsyncadd %s266, 0
          %s276 = smul.addr %s273, 8
          %s277 = scalar_lea.hbm %s3, %s276
          %s278 = sshll.u32 %s269, 4
          %s279 = int_to_ptr.vmem [resolvable:$true] %s278
          %s280 = sshll.u32 %s277, 4
          %s281 = int_to_ptr.hbm [resolvable:$true] %s280
          %286 = dma.vmem_to_hbm [thread:$0]  %s279, 256, %s281, %s266, 128, 128, 8
        $region36: #{patch_embedding_forward.1} parent=31 // pred_fallthru
          _
      $region32: #{patch_embedding_forward.1} parent=5 // pred_fallthru
        _
      %p287 = scmp.le.s32.totalorder 2, %s12
      // Predicated region
      $region37: #{patch_embedding_forward.1} parent=5 // pred_check
        %p288 = pneg %p287
      $region38: #{patch_embedding_forward.1} parent=5 // pred_check_branch
        %290 = sbr.rel (%p288) target = $region40
      $region39: #{patch_embedding_forward.1} parent=5 // pred_region
        %s291 = ssub.s32 %s12, 2
        // Predicated region
        $region41: #{patch_embedding_forward.1} parent=39 // pred_check
          %p292 = pneg %p109
        $region42: #{patch_embedding_forward.1} parent=39 // pred_check_branch
          %294 = sbr.rel (%p292) target = $region44
        $region43: #{patch_embedding_forward.1} parent=39 // pred_region
          %s295 = sand.u32 %s94, 1
          %s296 = scalar_lea.sflag [#allocation3], %s295
          %s297 = sand.u32 %s94, 1
          %s298 = smul.addr %s297, 16
          %s299 = scalar_lea.vmem [#allocation2], %s298
          %301 = dma.done %s296, 256
        $region44: #{patch_embedding_forward.1} parent=39 // pred_fallthru
          _
      $region40: #{patch_embedding_forward.1} parent=5 // pred_fallthru
        _
    $region6: #{patch_embedding_forward.1} parent=1 // loop_footer
      %s16 = sadd.s32 1, %s12
    $region7: #{patch_embedding_forward.1} parent=1 // loop_footer_branch
      %11 = sbr.rel target = $region3
    $region8: #{patch_embedding_forward.1} parent=1 // loop_exit
      _
    %302 = vsyncpa [#allocation3], 1
    %s303 = scalar_lea.sflag [#allocation3], 1
    %304 = vsyncpa %s303, 1

</llo_original>
